<compile_context>
chip_gen: v6e
topology: v6e:2x2x1
jax: 0.10.0
libtpu: 0.0.40
codegen_flags: <defaults>
</compile_context>

<pallas_src>
import functools

import jax
import jax.numpy as jnp
from jax.experimental import pallas as pl
from jax.experimental.pallas import tpu as pltpu


# ----------------------------------------------------------------------------
# Pallas kernel
# ----------------------------------------------------------------------------
def _loss_kernel(nrows_ref, out_ref, lm_ref, o_ref, *, tm):
    """One row tile -> scalar partial sum of a_i^2 / b_i^2 over its valid rows."""
    i = pl.program_id(0)
    n_valid = nrows_ref[0]                               # SMEM scalar (batch size)

    out = out_ref[...].astype(jnp.float32)               # (tm, D)
    lm = lm_ref[...].astype(jnp.float32)                 # (tm, D)

    # a^2 = || outputs[i,:] - landmarks[i,:] ||^2        (row-wise)
    diff = out - lm
    a2 = jnp.sum(diff * diff, axis=-1, keepdims=True)    # (tm, 1)

    # b^2 = || landmarks[i,0:2] - landmarks[i,2:4] ||^2
    db = lm[:, 0:2] - lm[:, 2:4]
    b2 = jnp.sum(db * db, axis=-1, keepdims=True)        # (tm, 1)

    # Mask rows beyond the real batch (the unpadded partial last block holds
    # undefined data).  safe_b2 avoids 0/0 or x/0 on those garbage rows; a
    # *valid* row with b2 == 0 still yields inf, matching the PyTorch module.
    rows = i * tm + jax.lax.broadcasted_iota(jnp.int32, (tm, 1), 0)
    valid = rows < n_valid
    safe_b2 = jnp.where(valid, b2, 1.0)
    ratio = jnp.where(valid, a2 / safe_b2, 0.0)          # (tm, 1)

    # Per-tile partial sum -> this tile's private (1,1,1) output block.
    o_ref[...] = jnp.sum(ratio, axis=0, keepdims=True).reshape(1, 1, 1)


# ----------------------------------------------------------------------------
# Wrapper
# ----------------------------------------------------------------------------
def loss_without_weight(outputs, landmarks, *, max_rows_per_tile=8192):
    """Pallas implementation of lossWithoutWeight.forward. Returns a scalar."""
    B, D = outputs.shape
    assert landmarks.shape == (B, D), (outputs.shape, landmarks.shape)
    assert D >= 4, "landmarks must have at least 4 columns (x0,y0,x1,y1,...)"

    # Row tile: multiple of 8 (sublane rule).  Cap it so the two
    # double-buffered input blocks fit comfortably in scoped VMEM; a (tm, D)
    # f32 block occupies tm * round_up(D, 128) * 4 bytes of VMEM.
    lanes = -(-D // 128) * 128
    buf_budget = 24 * 1024 * 1024                       # 2 inputs x 2 buffers
    tm_vmem_cap = max(8, (buf_budget // (4 * lanes * 4) // 8) * 8)
    tm_cap = max(8, (max_rows_per_tile // 8) * 8)
    tm = min(max(8, -(-B // 8) * 8), tm_cap, tm_vmem_cap)

    nt = pl.cdiv(B, tm)                                  # no padding of the inputs
    n_valid = jnp.full((1,), B, jnp.int32)               # scalar-prefetch operand

    # Explicit scoped-VMEM limit: enough for the double-buffered blocks plus
    # headroom, and within every generation's physical VMEM (incl. v7x 64 MiB).
    vmem_limit = min(48 * 1024 * 1024,
                     max(32 * 1024 * 1024, 4 * tm * lanes * 4 + 8 * 1024 * 1024))

    partials = pl.pallas_call(
        functools.partial(_loss_kernel, tm=tm),
        out_shape=jax.ShapeDtypeStruct((nt, 1, 1), jnp.float32),
        grid_spec=pltpu.PrefetchScalarGridSpec(
            num_scalar_prefetch=1,
            grid=(nt,),
            in_specs=[
                pl.BlockSpec((tm, D), lambda i, n: (i, 0)),
                pl.BlockSpec((tm, D), lambda i, n: (i, 0)),
            ],
            out_specs=pl.BlockSpec((1, 1, 1), lambda i, n: (i, 0, 0)),
        ),
        compiler_params=pltpu.CompilerParams(
            dimension_semantics=("parallel",),           # independent tiles (megacore-friendly)
            vmem_limit_bytes=int(vmem_limit),
        ),
    )(n_valid, outputs, landmarks)

    return jnp.sum(partials)                             # tiny (nt,1,1) -> scalar


# ----------------------------------------------------------------------------
# Pure-JAX reference (mirrors the PyTorch loop exactly)
# ----------------------------------------------------------------------------
def ref_loss(outputs, landmarks):
    a2 = jnp.sum((outputs - landmarks) ** 2, axis=1)
    b2 = jnp.sum((landmarks[:, 0:2] - landmarks[:, 2:4]) ** 2, axis=1)
    return jnp.sum(a2 / b2)


if __name__ == "__main__":
    key = jax.random.PRNGKey(0)
    k1, k2, k3, k4 = jax.random.split(key, 4)

    # Small case: batch=2, 8 landmark coordinates (4 points x 2 coords).
    B, D = 2, 8
    outputs = jax.random.normal(k1, (B, D), jnp.float32)
    landmarks = jax.random.normal(k2, (B, D), jnp.float32)

    loss_fn = jax.jit(loss_without_weight)
    loss = jax.block_until_ready(loss_fn(outputs, landmarks))
    ref = jax.block_until_ready(ref_loss(outputs, landmarks))
    assert loss.shape == (), loss.shape
    assert jnp.allclose(loss, ref, atol=1e-5, rtol=1e-5), (float(loss), float(ref))

    # Ragged batch exercising the unpadded partial last tile
    # (50 rows, tm=16 -> 4 tiles, last tile has 2 valid rows).
    B2, D2 = 50, 10
    outputs2 = jax.random.normal(k3, (B2, D2), jnp.float32)
    landmarks2 = jax.random.normal(k4, (B2, D2), jnp.float32)
    loss_fn2 = jax.jit(functools.partial(loss_without_weight,
                                         max_rows_per_tile=16))
    loss2 = jax.block_until_ready(loss_fn2(outputs2, landmarks2))
    ref2 = jax.block_until_ready(ref_loss(outputs2, landmarks2))
    assert jnp.allclose(loss2, ref2, atol=1e-4, rtol=1e-4), (
        float(loss2), float(ref2))

    print("KERNEL_OK")
</pallas_src>

<mosaic_0001>
module attributes {stable_mosaic.version = 11 : i64} {
  func.func @_loss_kernel(%arg0: i32, %arg1: memref<1xi32, #tpu.memory_space<smem>>, %arg2: memref<8x8xf32, #tpu.memory_space<vmem>>, %arg3: memref<8x8xf32, #tpu.memory_space<vmem>>, %arg4: memref<1x1x1xf32, #tpu.memory_space<vmem>>) attributes {dimension_semantics = [#tpu.dimension_semantics<parallel>], iteration_bounds = array<i64: 1>, scalar_prefetch = 1 : i64, scratch_operands = 0 : i64, tpu.core_type = #tpu.core_type<tc>, window_params = [{transform_indices = @transform_0, window_bounds = array<i64: 8, 8>}, {transform_indices = @transform_1, window_bounds = array<i64: 8, 8>}, {transform_indices = @transform_2, window_bounds = array<i64: 1, 1, 1>}]} {
    %c0 = arith.constant 0 : index
    %0 = memref.load %arg1[%c0] : memref<1xi32, #tpu.memory_space<smem>>
    %c0_0 = arith.constant 0 : index
    %c0_1 = arith.constant 0 : index
    %1 = vector.load %arg2[%c0_0, %c0_1] : memref<8x8xf32, #tpu.memory_space<vmem>>, vector<8x8xf32>
    %c0_2 = arith.constant 0 : index
    %c0_3 = arith.constant 0 : index
    %2 = vector.load %arg3[%c0_2, %c0_3] : memref<8x8xf32, #tpu.memory_space<vmem>>, vector<8x8xf32>
    %3 = arith.subf %1, %2 : vector<8x8xf32>
    %4 = arith.mulf %3, %3 : vector<8x8xf32>
    %cst = arith.constant dense<0.000000e+00> : vector<8xf32>
    %5 = vector.multi_reduction <add>, %4, %cst [1] : vector<8x8xf32> to vector<8xf32>
    %6 = vector.shape_cast %5 : vector<8xf32> to vector<8x1xf32>
    %7 = vector.extract_strided_slice %2 {offsets = [0, 0], sizes = [8, 2], strides = [1, 1]} : vector<8x8xf32> to vector<8x2xf32>
    %8 = vector.extract_strided_slice %2 {offsets = [0, 2], sizes = [8, 2], strides = [1, 1]} : vector<8x8xf32> to vector<8x2xf32>
    %9 = arith.subf %7, %8 : vector<8x2xf32>
    %10 = arith.mulf %9, %9 : vector<8x2xf32>
    %cst_4 = arith.constant dense<0.000000e+00> : vector<8xf32>
    %11 = vector.multi_reduction <add>, %10, %cst_4 [1] : vector<8x2xf32> to vector<8xf32>
    %12 = vector.shape_cast %11 : vector<8xf32> to vector<8x1xf32>
    %c8_i32 = arith.constant 8 : i32
    %13 = arith.muli %arg0, %c8_i32 : i32
    %14 = tpu.iota {dimensions = array<i32: 0>} : vector<8x1xi32>
    %15 = vector.broadcast %13 : i32 to vector<8x1xi32>
    %16 = arith.addi %15, %14 : vector<8x1xi32>
    %17 = vector.broadcast %0 : i32 to vector<8x1xi32>
    %18 = arith.cmpi slt, %16, %17 : vector<8x1xi32>
    %cst_5 = arith.constant 1.000000e+00 : f32
    %19 = vector.broadcast %cst_5 : f32 to vector<8x1xf32>
    %20 = arith.select %18, %12, %19 : vector<8x1xi1>, vector<8x1xf32>
    %21 = arith.divf %6, %20 : vector<8x1xf32>
    %cst_6 = arith.constant 0.000000e+00 : f32
    %22 = vector.broadcast %cst_6 : f32 to vector<8x1xf32>
    %23 = arith.select %18, %21, %22 : vector<8x1xi1>, vector<8x1xf32>
    %cst_7 = arith.constant dense<0.000000e+00> : vector<1xf32>
    %24 = vector.multi_reduction <add>, %23, %cst_7 [0] : vector<8x1xf32> to vector<1xf32>
    %25 = vector.shape_cast %24 : vector<1xf32> to vector<1x1xf32>
    %26 = vector.shape_cast %25 : vector<1x1xf32> to vector<1x1x1xf32>
    %c0_8 = arith.constant 0 : index
    %c0_9 = arith.constant 0 : index
    %c0_10 = arith.constant 0 : index
    %27 = vector.load %arg4[%c0_8, %c0_9, %c0_10] : memref<1x1x1xf32, #tpu.memory_space<vmem>>, vector<1x1x1xf32>
    tpu.vector_store %arg4[%c0_8, %c0_9, %c0_10], %26 {strides = array<i32>} : memref<1x1x1xf32, #tpu.memory_space<vmem>>, vector<1x1x1xf32>,
    return
  }
  func.func @transform_0(%arg0: i32, %arg1: memref<1xi32, #tpu.memory_space<smem>>) -> (i32, i32) {
    %c0_i32 = arith.constant 0 : i32
    %c0_i32_0 = arith.constant 0 : i32
    return %arg0, %c0_i32 : i32, i32
  }
  func.func @transform_1(%arg0: i32, %arg1: memref<1xi32, #tpu.memory_space<smem>>) -> (i32, i32) {
    %c0_i32 = arith.constant 0 : i32
    %c0_i32_0 = arith.constant 0 : i32
    return %arg0, %c0_i32 : i32, i32
  }
  func.func @transform_2(%arg0: i32, %arg1: memref<1xi32, #tpu.memory_space<smem>>) -> (i32, i32, i32) {
    %c0_i32 = arith.constant 0 : i32
    %c0_i32_0 = arith.constant 0 : i32
    %c0_i32_1 = arith.constant 0 : i32
    return %arg0, %c0_i32, %c0_i32_0 : i32, i32, i32
  }
}

</mosaic_0001>

<llo_original>
// kernel: loss_without_weight.1
$region0: #{loss_without_weight.1}
  #allocation0 [shape = 'u32[]', space=smem, size = 0x4, offset = 0x4, fixed_abs, tag = 'smem constant byte address 0x4 - core index']
  #allocation1 [shape = 'u32[144,128]{1,0:T(1,128)}', space=vmem, size = 0x12000, scoped, tag = 'internal scratch']
  #allocation2 [shape = 's32[1]{0}', space=sflag, size = 0x4, scoped, tag = 'scoped memory for loss_without_weight.1']
  #allocation3 [shape = 's32[1]{0:T(128)S(6)}', space=smem, size = 0x200, scoped, tag = 'prefetched SMEM operand 0']
  %s0 = inlined_call_operand.<no memory space> [shape: s32[1], index: 0, kind: input, shape index: {}]
  %s1 = inlined_call_operand.hbm [shape: f32[2,8], index: 1, kind: input, shape index: {}]
  %s2 = inlined_call_operand.hbm [shape: f32[2,8], index: 2, kind: input, shape index: {}]
  %s3 = inlined_call_operand.hbm [shape: f32[1,1,1], index: 3, kind: output, shape index: {}]
  %s4 = sld [smem:[#allocation0]]
  $region26: #{loss_without_weight.1} parent=0
    _
  %s6 = ssub.s32 1, %s4
  %s7 = scalar_select 0, %s6, %s4
  %8 = sst [smem:[#allocation3]] %s0
  $region1: #{loss_without_weight.1} parent=0
    #allocation4 [shape = 'u8[4096]{0}', space=vmem, size = 0x1000, scoped, tag = 'input window, operand 1, single buffered']
    #allocation5 [shape = 's32[1]{0}', space=sflag, size = 0x4, scoped, tag = 'scoped memory for loss_without_weight.1']
    #allocation6 [shape = 's32[1]{0}', space=sflag, size = 0x4, scoped, tag = 'scoped memory for loss_without_weight.1']
    #allocation7 [shape = 'u8[4096]{0}', space=vmem, size = 0x1000, scoped, tag = 'input window, operand 2, single buffered']
    #allocation8 [shape = 's32[1]{0}', space=sflag, size = 0x4, scoped, tag = 'scoped memory for loss_without_weight.1']
    #allocation9 [shape = 'u8[512]{0}', space=vmem, size = 0x400, scoped, tag = 'output window, operand 0, single buffered']
    %9 = vsyncpa [#allocation5], 0
    %10 = vsyncpa [#allocation8], 0
    %11 = vsyncpa [#allocation6], 0
    // Predicated region
    $region2: #{loss_without_weight.1} parent=1 // pred_check
      _
    $region3: #{loss_without_weight.1} parent=1 // pred_check_branch
      %13 = sbr.rel (0) target = $region5
    $region4: #{loss_without_weight.1} parent=1 // pred_region
      %s15 = ssub.s32 128, 32
      %16 = vsyncadd [#allocation5], %s15
      %s17 = sshll.u32 [#allocation4], 4
      %s18 = int_to_ptr.vmem [resolvable:$true] %s17
      %23 = dma.hbm_to_vmem [thread:$0]  %s1, 32, %s18, [#allocation5], 32, 32, 2
    $region5: #{loss_without_weight.1} parent=1 // pred_fallthru
      _
    // Predicated region
    $region6: #{loss_without_weight.1} parent=1 // pred_check
      _
    $region7: #{loss_without_weight.1} parent=1 // pred_check_branch
      %25 = sbr.rel (0) target = $region9
    $region8: #{loss_without_weight.1} parent=1 // pred_region
      %s27 = ssub.s32 128, 32
      %28 = vsyncadd [#allocation8], %s27
      %s29 = sshll.u32 [#allocation7], 4
      %s30 = int_to_ptr.vmem [resolvable:$true] %s29
      %35 = dma.hbm_to_vmem [thread:$0]  %s2, 32, %s30, [#allocation8], 32, 32, 2
    $region9: #{loss_without_weight.1} parent=1 // pred_fallthru
      _
    // Predicated region
    $region10: #{loss_without_weight.1} parent=1 // pred_check
      _
    $region11: #{loss_without_weight.1} parent=1 // pred_check_branch
      %37 = sbr.rel (0) target = $region13
    $region12: #{loss_without_weight.1} parent=1 // pred_region
      %38 = dma.done [#allocation5], 128
    $region13: #{loss_without_weight.1} parent=1 // pred_fallthru
      _
    // Predicated region
    $region14: #{loss_without_weight.1} parent=1 // pred_check
      _
    $region15: #{loss_without_weight.1} parent=1 // pred_check_branch
      %40 = sbr.rel (0) target = $region17
    $region16: #{loss_without_weight.1} parent=1 // pred_region
      %41 = dma.done [#allocation8], 128
    $region17: #{loss_without_weight.1} parent=1 // pred_fallthru
      _
    %s42 = sld [smem:[#allocation3]]
    %v43 = vld [vmem:[#allocation4] sm:$0xff]
    %v44 = vld [vmem:[#allocation7] sm:$0xff]
    %v45 = vsub.f32 %v43, %v44
    %v46 = vmul.f32 %v45, %v45
    %vm47 = vcmask 64512
    %v48 = vsel %vm47, %v46, 0.0
    %49 = vadd.xlane.f32.xlu0 %v48
    %v50 = vpop.xlane.xlu0 %49
    %52 = vrot.lane.b32.xlu0 %v44, 126
    %v53 = vpop.permute.xlu0 %52
    %v55 = vsub.f32 %v44, %v53
    %v56 = vmul.f32 %v55, %v55
    %vm57 = vcmask 15360
    %v58 = vsel %vm57, %v56, 0.0
    %59 = vadd.xlane.f32.xlu0 %v58
    %v60 = vpop.xlane.xlu0 %59
    %s61 = smul.u32 0, 8
    %v62 = vlaneseq
    %v63 = vshrl.u32 %v62, 7
    %v64 = vstv %s61
    %v65 = vadd.s32 %v64, %v63
    %v66 = vstv %s42
    %vm67 = vcmp.lt.s32.totalorder %v65, %v66
    %v68 = vsel %vm67, %v60, 1.0
    %v69 = vrcp.pop %v68
    %v70 = vmul.f32 %v50, %v69
    %v71 = vsel %vm67, %v70, 0.0
    %v72 = vrot.slane %v71, 4
    %v73 = vadd.f32 %v71, %v72
    %v74 = vrot.slane %v73, 2
    %v75 = vadd.f32 %v73, %v74
    %v76 = vrot.slane %v75, 1
    %v77 = vadd.f32 %v75, %v76
    %vm78 = vcmask 0
    %79 = vst.msk [vmem:[#allocation9] sm:$0x1] %vm78, %v77
    // Predicated region
    $region18: #{loss_without_weight.1} parent=1 // pred_check
      _
    $region19: #{loss_without_weight.1} parent=1 // pred_check_branch
      %81 = sbr.rel (0) target = $region21
    $region20: #{loss_without_weight.1} parent=1 // pred_region
      %s83 = ssub.s32 16, 16
      %84 = vsyncadd [#allocation6], %s83
      %s86 = sshll.u32 [#allocation9], 4
      %s87 = int_to_ptr.vmem [resolvable:$true] %s86
      %89 = dma.vmem_to_hbm [thread:$0]  %s87, 16, %s3, [#allocation6]
    $region21: #{loss_without_weight.1} parent=1 // pred_fallthru
      _
    // Predicated region
    $region22: #{loss_without_weight.1} parent=1 // pred_check
      _
    $region23: #{loss_without_weight.1} parent=1 // pred_check_branch
      %91 = sbr.rel (0) target = $region25
    $region24: #{loss_without_weight.1} parent=1 // pred_region
      %92 = dma.done [#allocation6], 16
    $region25: #{loss_without_weight.1} parent=1 // pred_fallthru
      _
    %93 = vsyncpa [#allocation5], 1
    %94 = vsyncpa [#allocation8], 1
    %95 = vsyncpa [#allocation6], 1

</llo_original>
